<compile_context>
chip_gen: v7x
topology: tpu7x:2x2x1
jax: 0.10.0
libtpu: 0.0.40
codegen_flags: <defaults>
</compile_context>

<pallas_src>
import functools

import jax
import jax.numpy as jnp
from jax import lax
from jax.experimental import pallas as pl
from jax.experimental.pallas import tpu as pltpu

_ROW_CHUNK = 32      # int8-tile-aligned rows loaded per inner-loop iteration
_SUB = 8             # f32-tile-aligned rows per arithmetic sub-step
_PAD_LOGIT = -1.0e4  # pad logit: exp(-|pad|) == 0 in f32 -> padded loss == 0 exactly


def _focal_loss_kernel(x_ref, t_ref, out_ref, *, alpha, gamma, block_m, width,
                       hard_targets):
    c0 = 1.0 - alpha          # alpha_t = c0 + c1 * t   (single FMA)
    c1 = 2.0 * alpha - 1.0
    n_chunks = block_m // _ROW_CHUNK

    def chunk_body(c, acc):
        r0 = pl.multiple_of(c * _ROW_CHUNK, _ROW_CHUNK)
        # One tile-aligned load of the narrow targets per chunk, upcast once.
        tb = t_ref[pl.ds(r0, _ROW_CHUNK), :].astype(jnp.float32)
        for s in range(_ROW_CHUNK // _SUB):   # static sub-steps: low vreg pressure
            ri = pl.multiple_of(c * _ROW_CHUNK + s * _SUB, _SUB)
            x = x_ref[pl.ds(ri, _SUB), :].astype(jnp.float32)
            t = tb[s * _SUB:(s + 1) * _SUB, :]
            alpha_t = c0 + c1 * t
            if hard_targets:
                # t in {0,1}: z = logit of the true class; exact identities,
                # only 2 transcendentals (exp, log1p) per element.
                z = jnp.where(t >= 0.5, x, -x)
                e = jnp.exp(-jnp.abs(z))
                bce = jnp.maximum(-z, 0.0) + jnp.log1p(e)        # == BCEWithLogits
                omp = jnp.where(z >= 0.0, e, 1.0) / (1.0 + e)    # == 1 - exp(-bce)
            else:
                # General (soft-label) path: same math as the reference.
                e = jnp.exp(-jnp.abs(x))
                bce = jnp.maximum(x, 0.0) - x * t + jnp.log1p(e)
                omp = 1.0 - jnp.exp(-bce)
            if gamma == 2.0:          # default: avoid pow on the EUP
                focal = omp * omp
            elif gamma == 1.0:
                focal = omp
            elif gamma == 0.0:
                focal = jnp.ones_like(omp)
            else:
                focal = omp ** gamma
            acc = acc + (alpha_t * focal) * bce
        return acc

    acc = lax.fori_loop(0, n_chunks, chunk_body,
                        jnp.zeros((_SUB, width), jnp.float32))

    # Lane-fold to one (8,128) tile of per-position partial sums (VPU adds only;
    # no XLU reduce, no cross-step dependency -> grid stays fully parallel).
    part = acc[:, 0:128]
    for k in range(1, width // 128):
        part = part + acc[:, k * 128:(k + 1) * 128]
    out_ref[...] = part[None]          # out block is (1, 8, 128)


def focal_loss(inputs: jax.Array, targets: jax.Array, *, alpha: float = 0.25,
               gamma: float = 2.0, reduction: str = "mean",
               hard_targets=None, block_m: int = 1024, width: int = 512) -> jax.Array:
    """Focal loss. `inputs` are logits, `targets` are labels of the same shape."""
    # Mirror the PyTorch module's argument coercion.
    if not isinstance(alpha, float) or not 0.0 < alpha < 1.0:
        alpha = 0.25
    if not isinstance(gamma, (float, int)) or gamma < 0:
        gamma = 2.0
    if reduction not in ("mean", "sum", "none"):
        reduction = "mean"
    if reduction == "none":
        # TODO(synk): 'none' reduction (per-element loss map) is not implemented;
        # the kernel is specialized for the scalar reductions used in training.
        raise NotImplementedError("reduction='none' is not supported by this kernel")

    width = max(128, (int(width) // 128) * 128)
    block_m = max(_ROW_CHUNK, (int(block_m) // _ROW_CHUNK) * _ROW_CHUNK)

    x_flat = jnp.ravel(inputs)                 # keep logits in their native dtype
    t_flat = jnp.ravel(targets)
    if t_flat.dtype == jnp.bool_:
        t_flat = t_flat.astype(jnp.int8)       # narrow targets -> less HBM traffic
    if hard_targets is None:
        hard_targets = bool(jnp.issubdtype(t_flat.dtype, jnp.integer))

    total = x_flat.shape[0]
    rows = -(-total // width)                                   # ceil
    rows = max(_ROW_CHUNK, ((rows + _ROW_CHUNK - 1) // _ROW_CHUNK) * _ROW_CHUNK)
    bm = min(block_m, rows)
    if bm >= rows and rows >= 2 * _ROW_CHUNK:
        # v7x has 2 TensorCores: keep >= 2 (parallel) grid steps when possible.
        bm = max(_ROW_CHUNK, (rows // 2 // _ROW_CHUNK) * _ROW_CHUNK)
    rows = ((rows + bm - 1) // bm) * bm
    padded = rows * width
    if padded != total:
        pad = padded - total
        # Pad with a huge negative logit / zero target: contributes exactly 0
        # loss, so no in-kernel masking is needed.
        x_flat = jnp.pad(x_flat, (0, pad), constant_values=_PAD_LOGIT)
        t_flat = jnp.pad(t_flat, (0, pad))
    x2 = x_flat.reshape(rows, width)
    t2 = t_flat.reshape(rows, width)
    grid_m = rows // bm

    kernel = functools.partial(
        _focal_loss_kernel, alpha=float(alpha), gamma=float(gamma),
        block_m=bm, width=width, hard_targets=bool(hard_targets))

    in_bytes = x2.size * x2.dtype.itemsize + t2.size * t2.dtype.itemsize
    out_bytes = grid_m * 8 * 128 * 4
    cost = pl.CostEstimate(
        flops=12 * padded,
        transcendentals=(2 if hard_targets else 3) * padded,
        bytes_accessed=in_bytes + out_bytes)

    cp_kwargs = dict(dimension_semantics=("parallel",))
    step_bytes = bm * width * (x2.dtype.itemsize + t2.dtype.itemsize)
    if 2 * step_bytes > 12 * 1024 * 1024:
        # Double-buffered blocks would brush v5e's 16 MiB scoped-VMEM default.
        cp_kwargs["vmem_limit_bytes"] = int(2 * step_bytes + (4 << 20))

    partials = pl.pallas_call(
        kernel,
        out_shape=jax.ShapeDtypeStruct((grid_m, 8, 128), jnp.float32),
        grid_spec=pltpu.PrefetchScalarGridSpec(
            num_scalar_prefetch=0,
            grid=(grid_m,),
            in_specs=[pl.BlockSpec((bm, width), lambda i: (i, 0)),
                      pl.BlockSpec((bm, width), lambda i: (i, 0))],
            out_specs=pl.BlockSpec((1, 8, 128), lambda i: (i, 0, 0))),
        compiler_params=pltpu.CompilerParams(**cp_kwargs),
        cost_estimate=cost,
    )(x2, t2)

    loss = jnp.sum(partials)
    if reduction == "mean":
        loss = loss / jnp.float32(total)
    if jnp.issubdtype(inputs.dtype, jnp.floating):
        loss = loss.astype(inputs.dtype)
    return loss


def _focal_loss_ref(x, t, alpha=0.25, gamma=2.0, reduction="mean"):
    x = x.astype(jnp.float32)
    t = t.astype(jnp.float32)
    bce = jnp.maximum(x, 0.0) - x * t + jnp.log1p(jnp.exp(-jnp.abs(x)))
    pt = jnp.exp(-bce)
    alpha_t = alpha * t + (1.0 - alpha) * (1.0 - t)
    fl = alpha_t * (1.0 - pt) ** gamma * bce
    return jnp.mean(fl) if reduction == "mean" else jnp.sum(fl)


if __name__ == "__main__":
    key = jax.random.PRNGKey(0)
    k1, k2, k3, k4, k5, k6, k7, k8 = jax.random.split(key, 8)

    # Case 1: 2-D logits + int8 hard targets, 'mean' (padding path, grid_m=1).
    x1 = jax.random.normal(k1, (16, 256), dtype=jnp.float32)
    t1 = (jax.random.uniform(k2, (16, 256)) < 0.5).astype(jnp.int8)
    got1 = jax.block_until_ready(focal_loss(x1, t1, alpha=0.25, gamma=2.0))
    ref1 = _focal_loss_ref(x1, t1, 0.25, 2.0, "mean")
    assert jnp.allclose(got1, ref1, rtol=1e-5, atol=1e-6), (got1, ref1)

    # Case 2: ragged 1-D per-edge logits (heavy padding, pad-value masking), 'sum'.
    x2 = jax.random.normal(k3, (1000,), dtype=jnp.float32)
    t2 = (jax.random.uniform(k4, (1000,)) < 0.3).astype(jnp.int8)
    got2 = jax.block_until_ready(focal_loss(x2, t2, reduction="sum"))
    ref2 = _focal_loss_ref(x2, t2, 0.25, 2.0, "sum")
    assert jnp.allclose(got2, ref2, rtol=1e-5, atol=1e-5), (got2, ref2)

    # Case 3: float {0,1} targets -> general (soft-label) path, 'mean'.
    x3 = jax.random.normal(k5, (8, 96), dtype=jnp.float32)
    t3 = (jax.random.uniform(k6, (8, 96)) < 0.5).astype(jnp.float32)
    got3 = jax.block_until_ready(focal_loss(x3, t3))
    ref3 = _focal_loss_ref(x3, t3, 0.25, 2.0, "mean")
    assert jnp.allclose(got3, ref3, rtol=1e-5, atol=1e-6), (got3, ref3)

    # Case 4: no padding, grid_m >= 2 (both v7x TCs) and >1 inner chunk per block.
    x4 = jax.random.normal(k7, (256, 256), dtype=jnp.float32)
    t4 = (jax.random.uniform(k8, (256, 256)) < 0.5).astype(jnp.int8)
    got4 = jax.block_until_ready(focal_loss(x4, t4))
    ref4 = _focal_loss_ref(x4, t4, 0.25, 2.0, "mean")
    assert jnp.allclose(got4, ref4, rtol=1e-5, atol=1e-6), (got4, ref4)

    print("KERNEL_OK")
</pallas_src>

<mosaic_0001>
module attributes {stable_mosaic.version = 11 : i64} {
  func.func @_focal_loss_kernel(%arg0: i32, %arg1: memref<32x512xf32, #tpu.memory_space<vmem>>, %arg2: memref<32x512xi8, #tpu.memory_space<vmem>>, %arg3: memref<1x8x128xf32, #tpu.memory_space<vmem>>) attributes {dimension_semantics = [#tpu.dimension_semantics<parallel>], iteration_bounds = array<i64: 1>, scalar_prefetch = 0 : i64, scratch_operands = 0 : i64, tpu.core_type = #tpu.core_type<tc>, window_params = [{transform_indices = @transform_0, window_bounds = array<i64: 32, 512>}, {transform_indices = @transform_1, window_bounds = array<i64: 32, 512>}, {transform_indices = @transform_2, window_bounds = array<i64: 1, 8, 128>}]} {
    %cst = arith.constant 0.000000e+00 : f32
    %0 = vector.broadcast %cst : f32 to vector<8x512xf32>
    %c0_i32 = arith.constant 0 : i32
    %c32_i32 = arith.constant 32 : i32
    %1 = arith.muli %c0_i32, %c32_i32 : i32
    %2 = tpu.assume_multiple %1, 32 : i32
    %3 = arith.index_cast %2 : i32 to index
    %c0 = arith.constant 0 : index
    %4 = vector.load %arg2[%3, %c0] : memref<32x512xi8, #tpu.memory_space<vmem>>, vector<32x512xi8>
    %5 = arith.sitofp %4 : vector<32x512xi8> to vector<32x512xf32>
    %c32_i32_0 = arith.constant 32 : i32
    %6 = arith.muli %c0_i32, %c32_i32_0 : i32
    %c0_i32_1 = arith.constant 0 : i32
    %7 = arith.addi %6, %c0_i32_1 : i32
    %8 = tpu.assume_multiple %7, 8 : i32
    %9 = arith.index_cast %8 : i32 to index
    %c0_2 = arith.constant 0 : index
    %10 = vector.load %arg1[%9, %c0_2] : memref<32x512xf32, #tpu.memory_space<vmem>>, vector<8x512xf32>
    %11 = vector.extract_strided_slice %5 {offsets = [0, 0], sizes = [8, 512], strides = [1, 1]} : vector<32x512xf32> to vector<8x512xf32>
    %cst_3 = arith.constant -5.000000e-01 : f32
    %12 = vector.broadcast %cst_3 : f32 to vector<8x512xf32>
    %13 = arith.mulf %12, %11 : vector<8x512xf32>
    %cst_4 = arith.constant 7.500000e-01 : f32
    %14 = vector.broadcast %cst_4 : f32 to vector<8x512xf32>
    %15 = arith.addf %14, %13 : vector<8x512xf32>
    %cst_5 = arith.constant 5.000000e-01 : f32
    %16 = vector.broadcast %cst_5 : f32 to vector<8x512xf32>
    %17 = arith.cmpf oge, %11, %16 : vector<8x512xf32>
    %cst_6 = arith.constant 0.000000e+00 : f32
    %18 = vector.broadcast %cst_6 : f32 to vector<8x512xf32>
    %19 = arith.subf %18, %10 : vector<8x512xf32>
    %20 = arith.select %17, %10, %19 : vector<8x512xi1>, vector<8x512xf32>
    %21 = math.absf %20 : vector<8x512xf32>
    %cst_7 = arith.constant 0.000000e+00 : f32
    %22 = vector.broadcast %cst_7 : f32 to vector<8x512xf32>
    %23 = arith.subf %22, %21 : vector<8x512xf32>
    %24 = math.exp %23 : vector<8x512xf32>
    %cst_8 = arith.constant 0.000000e+00 : f32
    %25 = vector.broadcast %cst_8 : f32 to vector<8x512xf32>
    %26 = arith.subf %25, %20 : vector<8x512xf32>
    %cst_9 = arith.constant 0.000000e+00 : f32
    %27 = vector.broadcast %cst_9 : f32 to vector<8x512xf32>
    %28 = arith.maximumf %26, %27 : vector<8x512xf32>
    %29 = math.log1p %24 : vector<8x512xf32>
    %30 = arith.addf %28, %29 : vector<8x512xf32>
    %cst_10 = arith.constant 0.000000e+00 : f32
    %31 = vector.broadcast %cst_10 : f32 to vector<8x512xf32>
    %32 = arith.cmpf oge, %20, %31 : vector<8x512xf32>
    %cst_11 = arith.constant 1.000000e+00 : f32
    %33 = vector.broadcast %cst_11 : f32 to vector<8x512xf32>
    %34 = arith.select %32, %24, %33 : vector<8x512xi1>, vector<8x512xf32>
    %cst_12 = arith.constant 1.000000e+00 : f32
    %35 = vector.broadcast %cst_12 : f32 to vector<8x512xf32>
    %36 = arith.addf %35, %24 : vector<8x512xf32>
    %37 = arith.divf %34, %36 : vector<8x512xf32>
    %38 = arith.mulf %37, %37 : vector<8x512xf32>
    %39 = arith.mulf %15, %38 : vector<8x512xf32>
    %40 = arith.mulf %39, %30 : vector<8x512xf32>
    %41 = arith.addf %0, %40 : vector<8x512xf32>
    %c32_i32_13 = arith.constant 32 : i32
    %42 = arith.muli %c0_i32, %c32_i32_13 : i32
    %c8_i32 = arith.constant 8 : i32
    %43 = arith.addi %42, %c8_i32 : i32
    %44 = tpu.assume_multiple %43, 8 : i32
    %45 = arith.index_cast %44 : i32 to index
    %c0_14 = arith.constant 0 : index
    %46 = vector.load %arg1[%45, %c0_14] : memref<32x512xf32, #tpu.memory_space<vmem>>, vector<8x512xf32>
    %47 = vector.extract_strided_slice %5 {offsets = [8, 0], sizes = [8, 512], strides = [1, 1]} : vector<32x512xf32> to vector<8x512xf32>
    %cst_15 = arith.constant -5.000000e-01 : f32
    %48 = vector.broadcast %cst_15 : f32 to vector<8x512xf32>
    %49 = arith.mulf %48, %47 : vector<8x512xf32>
    %cst_16 = arith.constant 7.500000e-01 : f32
    %50 = vector.broadcast %cst_16 : f32 to vector<8x512xf32>
    %51 = arith.addf %50, %49 : vector<8x512xf32>
    %cst_17 = arith.constant 5.000000e-01 : f32
    %52 = vector.broadcast %cst_17 : f32 to vector<8x512xf32>
    %53 = arith.cmpf oge, %47, %52 : vector<8x512xf32>
    %cst_18 = arith.constant 0.000000e+00 : f32
    %54 = vector.broadcast %cst_18 : f32 to vector<8x512xf32>
    %55 = arith.subf %54, %46 : vector<8x512xf32>
    %56 = arith.select %53, %46, %55 : vector<8x512xi1>, vector<8x512xf32>
    %57 = math.absf %56 : vector<8x512xf32>
    %cst_19 = arith.constant 0.000000e+00 : f32
    %58 = vector.broadcast %cst_19 : f32 to vector<8x512xf32>
    %59 = arith.subf %58, %57 : vector<8x512xf32>
    %60 = math.exp %59 : vector<8x512xf32>
    %cst_20 = arith.constant 0.000000e+00 : f32
    %61 = vector.broadcast %cst_20 : f32 to vector<8x512xf32>
    %62 = arith.subf %61, %56 : vector<8x512xf32>
    %cst_21 = arith.constant 0.000000e+00 : f32
    %63 = vector.broadcast %cst_21 : f32 to vector<8x512xf32>
    %64 = arith.maximumf %62, %63 : vector<8x512xf32>
    %65 = math.log1p %60 : vector<8x512xf32>
    %66 = arith.addf %64, %65 : vector<8x512xf32>
    %cst_22 = arith.constant 0.000000e+00 : f32
    %67 = vector.broadcast %cst_22 : f32 to vector<8x512xf32>
    %68 = arith.cmpf oge, %56, %67 : vector<8x512xf32>
    %cst_23 = arith.constant 1.000000e+00 : f32
    %69 = vector.broadcast %cst_23 : f32 to vector<8x512xf32>
    %70 = arith.select %68, %60, %69 : vector<8x512xi1>, vector<8x512xf32>
    %cst_24 = arith.constant 1.000000e+00 : f32
    %71 = vector.broadcast %cst_24 : f32 to vector<8x512xf32>
    %72 = arith.addf %71, %60 : vector<8x512xf32>
    %73 = arith.divf %70, %72 : vector<8x512xf32>
    %74 = arith.mulf %73, %73 : vector<8x512xf32>
    %75 = arith.mulf %51, %74 : vector<8x512xf32>
    %76 = arith.mulf %75, %66 : vector<8x512xf32>
    %77 = arith.addf %41, %76 : vector<8x512xf32>
    %c32_i32_25 = arith.constant 32 : i32
    %78 = arith.muli %c0_i32, %c32_i32_25 : i32
    %c16_i32 = arith.constant 16 : i32
    %79 = arith.addi %78, %c16_i32 : i32
    %80 = tpu.assume_multiple %79, 8 : i32
    %81 = arith.index_cast %80 : i32 to index
    %c0_26 = arith.constant 0 : index
    %82 = vector.load %arg1[%81, %c0_26] : memref<32x512xf32, #tpu.memory_space<vmem>>, vector<8x512xf32>
    %83 = vector.extract_strided_slice %5 {offsets = [16, 0], sizes = [8, 512], strides = [1, 1]} : vector<32x512xf32> to vector<8x512xf32>
    %cst_27 = arith.constant -5.000000e-01 : f32
    %84 = vector.broadcast %cst_27 : f32 to vector<8x512xf32>
    %85 = arith.mulf %84, %83 : vector<8x512xf32>
    %cst_28 = arith.constant 7.500000e-01 : f32
    %86 = vector.broadcast %cst_28 : f32 to vector<8x512xf32>
    %87 = arith.addf %86, %85 : vector<8x512xf32>
    %cst_29 = arith.constant 5.000000e-01 : f32
    %88 = vector.broadcast %cst_29 : f32 to vector<8x512xf32>
    %89 = arith.cmpf oge, %83, %88 : vector<8x512xf32>
    %cst_30 = arith.constant 0.000000e+00 : f32
    %90 = vector.broadcast %cst_30 : f32 to vector<8x512xf32>
    %91 = arith.subf %90, %82 : vector<8x512xf32>
    %92 = arith.select %89, %82, %91 : vector<8x512xi1>, vector<8x512xf32>
    %93 = math.absf %92 : vector<8x512xf32>
    %cst_31 = arith.constant 0.000000e+00 : f32
    %94 = vector.broadcast %cst_31 : f32 to vector<8x512xf32>
    %95 = arith.subf %94, %93 : vector<8x512xf32>
    %96 = math.exp %95 : vector<8x512xf32>
    %cst_32 = arith.constant 0.000000e+00 : f32
    %97 = vector.broadcast %cst_32 : f32 to vector<8x512xf32>
    %98 = arith.subf %97, %92 : vector<8x512xf32>
    %cst_33 = arith.constant 0.000000e+00 : f32
    %99 = vector.broadcast %cst_33 : f32 to vector<8x512xf32>
    %100 = arith.maximumf %98, %99 : vector<8x512xf32>
    %101 = math.log1p %96 : vector<8x512xf32>
    %102 = arith.addf %100, %101 : vector<8x512xf32>
    %cst_34 = arith.constant 0.000000e+00 : f32
    %103 = vector.broadcast %cst_34 : f32 to vector<8x512xf32>
    %104 = arith.cmpf oge, %92, %103 : vector<8x512xf32>
    %cst_35 = arith.constant 1.000000e+00 : f32
    %105 = vector.broadcast %cst_35 : f32 to vector<8x512xf32>
    %106 = arith.select %104, %96, %105 : vector<8x512xi1>, vector<8x512xf32>
    %cst_36 = arith.constant 1.000000e+00 : f32
    %107 = vector.broadcast %cst_36 : f32 to vector<8x512xf32>
    %108 = arith.addf %107, %96 : vector<8x512xf32>
    %109 = arith.divf %106, %108 : vector<8x512xf32>
    %110 = arith.mulf %109, %109 : vector<8x512xf32>
    %111 = arith.mulf %87, %110 : vector<8x512xf32>
    %112 = arith.mulf %111, %102 : vector<8x512xf32>
    %113 = arith.addf %77, %112 : vector<8x512xf32>
    %c32_i32_37 = arith.constant 32 : i32
    %114 = arith.muli %c0_i32, %c32_i32_37 : i32
    %c24_i32 = arith.constant 24 : i32
    %115 = arith.addi %114, %c24_i32 : i32
    %116 = tpu.assume_multiple %115, 8 : i32
    %117 = arith.index_cast %116 : i32 to index
    %c0_38 = arith.constant 0 : index
    %118 = vector.load %arg1[%117, %c0_38] : memref<32x512xf32, #tpu.memory_space<vmem>>, vector<8x512xf32>
    %119 = vector.extract_strided_slice %5 {offsets = [24, 0], sizes = [8, 512], strides = [1, 1]} : vector<32x512xf32> to vector<8x512xf32>
    %cst_39 = arith.constant -5.000000e-01 : f32
    %120 = vector.broadcast %cst_39 : f32 to vector<8x512xf32>
    %121 = arith.mulf %120, %119 : vector<8x512xf32>
    %cst_40 = arith.constant 7.500000e-01 : f32
    %122 = vector.broadcast %cst_40 : f32 to vector<8x512xf32>
    %123 = arith.addf %122, %121 : vector<8x512xf32>
    %cst_41 = arith.constant 5.000000e-01 : f32
    %124 = vector.broadcast %cst_41 : f32 to vector<8x512xf32>
    %125 = arith.cmpf oge, %119, %124 : vector<8x512xf32>
    %cst_42 = arith.constant 0.000000e+00 : f32
    %126 = vector.broadcast %cst_42 : f32 to vector<8x512xf32>
    %127 = arith.subf %126, %118 : vector<8x512xf32>
    %128 = arith.select %125, %118, %127 : vector<8x512xi1>, vector<8x512xf32>
    %129 = math.absf %128 : vector<8x512xf32>
    %cst_43 = arith.constant 0.000000e+00 : f32
    %130 = vector.broadcast %cst_43 : f32 to vector<8x512xf32>
    %131 = arith.subf %130, %129 : vector<8x512xf32>
    %132 = math.exp %131 : vector<8x512xf32>
    %cst_44 = arith.constant 0.000000e+00 : f32
    %133 = vector.broadcast %cst_44 : f32 to vector<8x512xf32>
    %134 = arith.subf %133, %128 : vector<8x512xf32>
    %cst_45 = arith.constant 0.000000e+00 : f32
    %135 = vector.broadcast %cst_45 : f32 to vector<8x512xf32>
    %136 = arith.maximumf %134, %135 : vector<8x512xf32>
    %137 = math.log1p %132 : vector<8x512xf32>
    %138 = arith.addf %136, %137 : vector<8x512xf32>
    %cst_46 = arith.constant 0.000000e+00 : f32
    %139 = vector.broadcast %cst_46 : f32 to vector<8x512xf32>
    %140 = arith.cmpf oge, %128, %139 : vector<8x512xf32>
    %cst_47 = arith.constant 1.000000e+00 : f32
    %141 = vector.broadcast %cst_47 : f32 to vector<8x512xf32>
    %142 = arith.select %140, %132, %141 : vector<8x512xi1>, vector<8x512xf32>
    %cst_48 = arith.constant 1.000000e+00 : f32
    %143 = vector.broadcast %cst_48 : f32 to vector<8x512xf32>
    %144 = arith.addf %143, %132 : vector<8x512xf32>
    %145 = arith.divf %142, %144 : vector<8x512xf32>
    %146 = arith.mulf %145, %145 : vector<8x512xf32>
    %147 = arith.mulf %123, %146 : vector<8x512xf32>
    %148 = arith.mulf %147, %138 : vector<8x512xf32>
    %149 = arith.addf %113, %148 : vector<8x512xf32>
    %c1_i32 = arith.constant 1 : i32
    %150 = vector.extract_strided_slice %149 {offsets = [0, 0], sizes = [8, 128], strides = [1, 1]} : vector<8x512xf32> to vector<8x128xf32>
    %151 = vector.extract_strided_slice %149 {offsets = [0, 128], sizes = [8, 128], strides = [1, 1]} : vector<8x512xf32> to vector<8x128xf32>
    %152 = arith.addf %150, %151 : vector<8x128xf32>
    %153 = vector.extract_strided_slice %149 {offsets = [0, 256], sizes = [8, 128], strides = [1, 1]} : vector<8x512xf32> to vector<8x128xf32>
    %154 = arith.addf %152, %153 : vector<8x128xf32>
    %155 = vector.extract_strided_slice %149 {offsets = [0, 384], sizes = [8, 128], strides = [1, 1]} : vector<8x512xf32> to vector<8x128xf32>
    %156 = arith.addf %154, %155 : vector<8x128xf32>
    %157 = vector.shape_cast %156 : vector<8x128xf32> to vector<1x8x128xf32>
    %c0_49 = arith.constant 0 : index
    %c0_50 = arith.constant 0 : index
    %c0_51 = arith.constant 0 : index
    %158 = vector.load %arg3[%c0_49, %c0_50, %c0_51] : memref<1x8x128xf32, #tpu.memory_space<vmem>>, vector<1x8x128xf32>
    tpu.vector_store %arg3[%c0_49, %c0_50, %c0_51], %157 {strides = array<i32>} : memref<1x8x128xf32, #tpu.memory_space<vmem>>, vector<1x8x128xf32>,
    return
  }
  func.func @transform_0(%arg0: i32) -> (i32, i32) {
    %c0_i32 = arith.constant 0 : i32
    %c0_i32_0 = arith.constant 0 : i32
    return %arg0, %c0_i32 : i32, i32
  }
  func.func @transform_1(%arg0: i32) -> (i32, i32) {
    %c0_i32 = arith.constant 0 : i32
    %c0_i32_0 = arith.constant 0 : i32
    return %arg0, %c0_i32 : i32, i32
  }
  func.func @transform_2(%arg0: i32) -> (i32, i32, i32) {
    %c0_i32 = arith.constant 0 : i32
    %c0_i32_0 = arith.constant 0 : i32
    %c0_i32_1 = arith.constant 0 : i32
    return %arg0, %c0_i32, %c0_i32_0 : i32, i32, i32
  }
}

</mosaic_0001>

<llo_original>
// kernel: tpu_custom_call.1
$region0: #{tpu_custom_call.1}
  #allocation0 [shape = 'u32[]', space=smem, size = 0x4, offset = 0x4, fixed_abs, tag = 'smem constant byte address 0x4 - core index']
  #allocation1 [shape = 'u32[144,128]{1,0:T(1,128)}', space=vmem, size = 0x12000, scoped, tag = 'internal scratch']
  %s0 = inlined_call_operand.hbm [shape: f32[32,512], index: 0, kind: input, shape index: {}]
  %s1 = inlined_call_operand.hbm [shape: s8[32,512], index: 1, kind: input, shape index: {}]
  %s2 = inlined_call_operand.hbm [shape: f32[1,8,128], index: 2, kind: output, shape index: {}]
  %s3 = sld [smem:[#allocation0]]
  $region26: #{tpu_custom_call.1} parent=0
    _
  %s5 = ssub.s32 1, %s3
  %s6 = scalar_select 0, %s5, %s3
  $region1: #{tpu_custom_call.1} parent=0
    #allocation2 [shape = 'u8[65536]{0}', space=vmem, size = 0x10000, scoped, tag = 'input window, operand 0, single buffered']
    #allocation3 [shape = 's32[1]{0}', space=sflag, size = 0x4, scoped, tag = 'scoped memory for tpu_custom_call.1']
    #allocation4 [shape = 's32[1]{0}', space=sflag, size = 0x4, scoped, tag = 'scoped memory for tpu_custom_call.1']
    #allocation5 [shape = 'u8[16384]{0}', space=vmem, size = 0x4000, scoped, tag = 'input window, operand 1, single buffered']
    #allocation6 [shape = 's32[1]{0}', space=sflag, size = 0x4, scoped, tag = 'scoped memory for tpu_custom_call.1']
    #allocation7 [shape = 'u8[4096]{0}', space=vmem, size = 0x1000, scoped, tag = 'output window, operand 0, single buffered']
    %7 = vsyncpa [#allocation3], 0
    %8 = vsyncpa [#allocation6], 0
    %9 = vsyncpa [#allocation4], 0
    // Predicated region
    $region2: #{tpu_custom_call.1} parent=1 // pred_check
      _
    $region3: #{tpu_custom_call.1} parent=1 // pred_check_branch
      %11 = sbr.rel (0) target = $region5
    $region4: #{tpu_custom_call.1} parent=1 // pred_region
      %s13 = ssub.s32 2048, 2048
      %14 = vsyncadd [#allocation3], %s13
      %s15 = sshll.u32 [#allocation2], 4
      %s16 = int_to_ptr.vmem [resolvable:$true] %s15
      %21 = dma.hbm_to_vmem [thread:$0]  %s0, 2048, %s16, [#allocation3], 512, 512, 32
    $region5: #{tpu_custom_call.1} parent=1 // pred_fallthru
      _
    // Predicated region
    $region6: #{tpu_custom_call.1} parent=1 // pred_check
      _
    $region7: #{tpu_custom_call.1} parent=1 // pred_check_branch
      %23 = sbr.rel (0) target = $region9
    $region8: #{tpu_custom_call.1} parent=1 // pred_region
      %s25 = ssub.s32 512, 512
      %26 = vsyncadd [#allocation6], %s25
      %s28 = sshll.u32 [#allocation5], 4
      %s29 = int_to_ptr.vmem [resolvable:$true] %s28
      %31 = dma.hbm_to_vmem [thread:$0]  %s1, 512, %s29, [#allocation6]
    $region9: #{tpu_custom_call.1} parent=1 // pred_fallthru
      _
    // Predicated region
    $region10: #{tpu_custom_call.1} parent=1 // pred_check
      _
    $region11: #{tpu_custom_call.1} parent=1 // pred_check_branch
      %33 = sbr.rel (0) target = $region13
    $region12: #{tpu_custom_call.1} parent=1 // pred_region
      %34 = dma.done [#allocation3], 2048
    $region13: #{tpu_custom_call.1} parent=1 // pred_fallthru
      _
    // Predicated region
    $region14: #{tpu_custom_call.1} parent=1 // pred_check
      _
    $region15: #{tpu_custom_call.1} parent=1 // pred_check_branch
      %36 = sbr.rel (0) target = $region17
    $region16: #{tpu_custom_call.1} parent=1 // pred_region
      %37 = dma.done [#allocation6], 512
    $region17: #{tpu_custom_call.1} parent=1 // pred_fallthru
      _
    %s38 = smul.u32 0, 4
    %s39 = smul.addr %s38, 8
    %s40 = scalar_lea.vmem [#allocation5], %s39
    %v41 = vld [vmem:[%s40] sm:$0xff]
    %v42 = vld [vmem:[%s40 + $0x8] sm:$0xff]
    %v43 = vld [vmem:[%s40 + $0x10] sm:$0xff]
    %v44 = vld [vmem:[%s40 + $0x18] sm:$0xff]
    %v45 = vunpack.c.0.s8 %v41
    %v46 = vunpack.c.0.s8 %v42
    %v47 = vunpack.c.0.s8 %v43
    %v48 = vunpack.c.0.s8 %v44
    %v49 = vunpack.c.1.s8 %v41
    %v50 = vunpack.c.1.s8 %v42
    %v51 = vunpack.c.1.s8 %v43
    %v52 = vunpack.c.1.s8 %v44
    %v53 = vunpack.c.2.s8 %v41
    %v54 = vunpack.c.2.s8 %v42
    %v55 = vunpack.c.2.s8 %v43
    %v56 = vunpack.c.2.s8 %v44
    %v57 = vunpack.c.3.s8 %v41
    %v58 = vunpack.c.3.s8 %v42
    %v59 = vunpack.c.3.s8 %v43
    %v60 = vunpack.c.3.s8 %v44
    %v61 = vcvt.s32.f32 %v45
    %v62 = vcvt.s32.f32 %v46
    %v63 = vcvt.s32.f32 %v47
    %v64 = vcvt.s32.f32 %v48
    %v65 = vcvt.s32.f32 %v49
    %v66 = vcvt.s32.f32 %v50
    %v67 = vcvt.s32.f32 %v51
    %v68 = vcvt.s32.f32 %v52
    %v69 = vcvt.s32.f32 %v53
    %v70 = vcvt.s32.f32 %v54
    %v71 = vcvt.s32.f32 %v55
    %v72 = vcvt.s32.f32 %v56
    %v73 = vcvt.s32.f32 %v57
    %v74 = vcvt.s32.f32 %v58
    %v75 = vcvt.s32.f32 %v59
    %v76 = vcvt.s32.f32 %v60
    %s77 = smul.u32 0, 4
    %s78 = smul.addr %s77, 8
    %s79 = scalar_lea.vmem [#allocation2], %s78
    %v80 = vld [vmem:[%s79] sm:$0xff]
    %v81 = vld [vmem:[%s79 + $0x8] sm:$0xff]
    %v82 = vld [vmem:[%s79 + $0x10] sm:$0xff]
    %v83 = vld [vmem:[%s79 + $0x18] sm:$0xff]
    %v84 = vmul.f32 %v61, -0.5
    %v85 = vmul.f32 %v62, -0.5
    %v86 = vmul.f32 %v63, -0.5
    %v87 = vmul.f32 %v64, -0.5
    %v88 = vadd.f32 %v84, 0.75
    %v89 = vadd.f32 %v85, 0.75
    %v90 = vadd.f32 %v86, 0.75
    %v91 = vadd.f32 %v87, 0.75
    %vm92 = vcmp.ge.f32.partialorder %v61, 0.5
    %vm93 = vcmp.ge.f32.partialorder %v62, 0.5
    %vm94 = vcmp.ge.f32.partialorder %v63, 0.5
    %vm95 = vcmp.ge.f32.partialorder %v64, 0.5
    %v96 = vsub.f32 0.0, %v80
    %v97 = vsub.f32 0.0, %v81
    %v98 = vsub.f32 0.0, %v82
    %v99 = vsub.f32 0.0, %v83
    %v100 = vsel %vm92, %v80, %v96
    %v101 = vsel %vm93, %v81, %v97
    %v102 = vsel %vm94, %v82, %v98
    %v103 = vsel %vm95, %v83, %v99
    %v104 = vand.u32 2147483647, %v100
    %v105 = vand.u32 2147483647, %v101
    %v106 = vand.u32 2147483647, %v102
    %v107 = vand.u32 2147483647, %v103
    %v108 = vsub.f32 0.0, %v104
    %v109 = vsub.f32 0.0, %v105
    %v110 = vsub.f32 0.0, %v106
    %v111 = vsub.f32 0.0, %v107
    %v112 = vmul.f32 %v108, 1.442695
    %v113 = vpow.pop %v112
    %v114 = vmul.f32 %v109, 1.442695
    %v115 = vpow.pop %v114
    %v116 = vmul.f32 %v110, 1.442695
    %v117 = vpow.pop %v116
    %v118 = vmul.f32 %v111, 1.442695
    %v119 = vpow.pop %v118
    %v120 = vsub.f32 0.0, %v100
    %v121 = vsub.f32 0.0, %v101
    %v122 = vsub.f32 0.0, %v102
    %v123 = vsub.f32 0.0, %v103
    %v124 = vmax.f32 %v120, 0.0
    %v125 = vmax.f32 %v121, 0.0
    %v126 = vmax.f32 %v122, 0.0
    %v127 = vmax.f32 %v123, 0.0
    %v128 = vadd.f32 %v113, 1.0
    %v129 = vlog2.pop %v128
    %v130 = vmul.f32 %v129, 0.6931472
    %v131 = vmul.f32 -0.5, %v113
    %v132 = vadd.f32 %v131, 1.0
    %v133 = vmul.f32 %v132, %v113
    %v134 = vand.u32 2147483647, %v113
    %vm135 = vcmp.lt.f32.partialorder %v134, 0.0004427343
    %v136 = vsel %vm135, %v133, %v130
    %v137 = vadd.f32 %v115, 1.0
    %v138 = vlog2.pop %v137
    %v139 = vmul.f32 %v138, 0.6931472
    %v140 = vmul.f32 -0.5, %v115
    %v141 = vadd.f32 %v140, 1.0
    %v142 = vmul.f32 %v141, %v115
    %v143 = vand.u32 2147483647, %v115
    %vm144 = vcmp.lt.f32.partialorder %v143, 0.0004427343
    %v145 = vsel %vm144, %v142, %v139
    %v146 = vadd.f32 %v117, 1.0
    %v147 = vlog2.pop %v146
    %v148 = vmul.f32 %v147, 0.6931472
    %v149 = vmul.f32 -0.5, %v117
    %v150 = vadd.f32 %v149, 1.0
    %v151 = vmul.f32 %v150, %v117
    %v152 = vand.u32 2147483647, %v117
    %vm153 = vcmp.lt.f32.partialorder %v152, 0.0004427343
    %v154 = vsel %vm153, %v151, %v148
    %v155 = vadd.f32 %v119, 1.0
    %v156 = vlog2.pop %v155
    %v157 = vmul.f32 %v156, 0.6931472
    %v158 = vmul.f32 -0.5, %v119
    %v159 = vadd.f32 %v158, 1.0
    %v160 = vmul.f32 %v159, %v119
    %v161 = vand.u32 2147483647, %v119
    %vm162 = vcmp.lt.f32.partialorder %v161, 0.0004427343
    %v163 = vsel %vm162, %v160, %v157
    %v164 = vadd.f32 %v124, %v136
    %v165 = vadd.f32 %v125, %v145
    %v166 = vadd.f32 %v126, %v154
    %v167 = vadd.f32 %v127, %v163
    %vm168 = vcmp.ge.f32.partialorder %v100, 0.0
    %vm169 = vcmp.ge.f32.partialorder %v101, 0.0
    %vm170 = vcmp.ge.f32.partialorder %v102, 0.0
    %vm171 = vcmp.ge.f32.partialorder %v103, 0.0
    %v172 = vsel %vm168, %v113, 1.0
    %v173 = vsel %vm169, %v115, 1.0
    %v174 = vsel %vm170, %v117, 1.0
    %v175 = vsel %vm171, %v119, 1.0
    %v176 = vadd.f32 %v113, 1.0
    %v177 = vadd.f32 %v115, 1.0
    %v178 = vadd.f32 %v117, 1.0
    %v179 = vadd.f32 %v119, 1.0
    %v180 = vrcp.pop %v176
    %v181 = vmul.f32 %v172, %v180
    %v182 = vrcp.pop %v177
    %v183 = vmul.f32 %v173, %v182
    %v184 = vrcp.pop %v178
    %v185 = vmul.f32 %v174, %v184
    %v186 = vrcp.pop %v179
    %v187 = vmul.f32 %v175, %v186
    %v188 = vmul.f32 %v181, %v181
    %v189 = vmul.f32 %v183, %v183
    %v190 = vmul.f32 %v185, %v185
    %v191 = vmul.f32 %v187, %v187
    %v192 = vmul.f32 %v88, %v188
    %v193 = vmul.f32 %v89, %v189
    %v194 = vmul.f32 %v90, %v190
    %v195 = vmul.f32 %v91, %v191
    %v196 = vmul.f32 %v192, %v164
    %v197 = vmul.f32 %v193, %v165
    %v198 = vmul.f32 %v194, %v166
    %v199 = vmul.f32 %v195, %v167
    %v200 = vadd.f32 %v196, 0.0
    %v201 = vadd.f32 %v197, 0.0
    %v202 = vadd.f32 %v198, 0.0
    %v203 = vadd.f32 %v199, 0.0
    %s204 = smul.u32 1, 4
    %s205 = smul.addr %s204, 8
    %s206 = scalar_lea.vmem [#allocation2], %s205
    %v207 = vld [vmem:[%s206] sm:$0xff]
    %v208 = vld [vmem:[%s206 + $0x8] sm:$0xff]
    %v209 = vld [vmem:[%s206 + $0x10] sm:$0xff]
    %v210 = vld [vmem:[%s206 + $0x18] sm:$0xff]
    %v211 = vmul.f32 %v65, -0.5
    %v212 = vmul.f32 %v66, -0.5
    %v213 = vmul.f32 %v67, -0.5
    %v214 = vmul.f32 %v68, -0.5
    %v215 = vadd.f32 %v211, 0.75
    %v216 = vadd.f32 %v212, 0.75
    %v217 = vadd.f32 %v213, 0.75
    %v218 = vadd.f32 %v214, 0.75
    %vm219 = vcmp.ge.f32.partialorder %v65, 0.5
    %vm220 = vcmp.ge.f32.partialorder %v66, 0.5
    %vm221 = vcmp.ge.f32.partialorder %v67, 0.5
    %vm222 = vcmp.ge.f32.partialorder %v68, 0.5
    %v223 = vsub.f32 0.0, %v207
    %v224 = vsub.f32 0.0, %v208
    %v225 = vsub.f32 0.0, %v209
    %v226 = vsub.f32 0.0, %v210
    %v227 = vsel %vm219, %v207, %v223
    %v228 = vsel %vm220, %v208, %v224
    %v229 = vsel %vm221, %v209, %v225
    %v230 = vsel %vm222, %v210, %v226
    %v231 = vand.u32 2147483647, %v227
    %v232 = vand.u32 2147483647, %v228
    %v233 = vand.u32 2147483647, %v229
    %v234 = vand.u32 2147483647, %v230
    %v235 = vsub.f32 0.0, %v231
    %v236 = vsub.f32 0.0, %v232
    %v237 = vsub.f32 0.0, %v233
    %v238 = vsub.f32 0.0, %v234
    %v239 = vmul.f32 %v235, 1.442695
    %v240 = vpow.pop %v239
    %v241 = vmul.f32 %v236, 1.442695
    %v242 = vpow.pop %v241
    %v243 = vmul.f32 %v237, 1.442695
    %v244 = vpow.pop %v243
    %v245 = vmul.f32 %v238, 1.442695
    %v246 = vpow.pop %v245
    %v247 = vsub.f32 0.0, %v227
    %v248 = vsub.f32 0.0, %v228
    %v249 = vsub.f32 0.0, %v229
    %v250 = vsub.f32 0.0, %v230
    %v251 = vmax.f32 %v247, 0.0
    %v252 = vmax.f32 %v248, 0.0
    %v253 = vmax.f32 %v249, 0.0
    %v254 = vmax.f32 %v250, 0.0
    %v255 = vadd.f32 %v240, 1.0
    %v256 = vlog2.pop %v255
    %v257 = vmul.f32 %v256, 0.6931472
    %v258 = vmul.f32 -0.5, %v240
    %v259 = vadd.f32 %v258, 1.0
    %v260 = vmul.f32 %v259, %v240
    %v261 = vand.u32 2147483647, %v240
    %vm262 = vcmp.lt.f32.partialorder %v261, 0.0004427343
    %v263 = vsel %vm262, %v260, %v257
    %v264 = vadd.f32 %v242, 1.0
    %v265 = vlog2.pop %v264
    %v266 = vmul.f32 %v265, 0.6931472
    %v267 = vmul.f32 -0.5, %v242
    %v268 = vadd.f32 %v267, 1.0
    %v269 = vmul.f32 %v268, %v242
    %v270 = vand.u32 2147483647, %v242
    %vm271 = vcmp.lt.f32.partialorder %v270, 0.0004427343
    %v272 = vsel %vm271, %v269, %v266
    %v273 = vadd.f32 %v244, 1.0
    %v274 = vlog2.pop %v273
    %v275 = vmul.f32 %v274, 0.6931472
    %v276 = vmul.f32 -0.5, %v244
    %v277 = vadd.f32 %v276, 1.0
    %v278 = vmul.f32 %v277, %v244
    %v279 = vand.u32 2147483647, %v244
    %vm280 = vcmp.lt.f32.partialorder %v279, 0.0004427343
    %v281 = vsel %vm280, %v278, %v275
    %v282 = vadd.f32 %v246, 1.0
    %v283 = vlog2.pop %v282
    %v284 = vmul.f32 %v283, 0.6931472
    %v285 = vmul.f32 -0.5, %v246
    %v286 = vadd.f32 %v285, 1.0
    %v287 = vmul.f32 %v286, %v246
    %v288 = vand.u32 2147483647, %v246
    %vm289 = vcmp.lt.f32.partialorder %v288, 0.0004427343
    %v290 = vsel %vm289, %v287, %v284
    %v291 = vadd.f32 %v251, %v263
    %v292 = vadd.f32 %v252, %v272
    %v293 = vadd.f32 %v253, %v281
    %v294 = vadd.f32 %v254, %v290
    %vm295 = vcmp.ge.f32.partialorder %v227, 0.0
    %vm296 = vcmp.ge.f32.partialorder %v228, 0.0
    %vm297 = vcmp.ge.f32.partialorder %v229, 0.0
    %vm298 = vcmp.ge.f32.partialorder %v230, 0.0
    %v299 = vsel %vm295, %v240, 1.0
    %v300 = vsel %vm296, %v242, 1.0
    %v301 = vsel %vm297, %v244, 1.0
    %v302 = vsel %vm298, %v246, 1.0
    %v303 = vadd.f32 %v240, 1.0
    %v304 = vadd.f32 %v242, 1.0
    %v305 = vadd.f32 %v244, 1.0
    %v306 = vadd.f32 %v246, 1.0
    %v307 = vrcp.pop %v303
    %v308 = vmul.f32 %v299, %v307
    %v309 = vrcp.pop %v304
    %v310 = vmul.f32 %v300, %v309
    %v311 = vrcp.pop %v305
    %v312 = vmul.f32 %v301, %v311
    %v313 = vrcp.pop %v306
    %v314 = vmul.f32 %v302, %v313
    %v315 = vmul.f32 %v308, %v308
    %v316 = vmul.f32 %v310, %v310
    %v317 = vmul.f32 %v312, %v312
    %v318 = vmul.f32 %v314, %v314
    %v319 = vmul.f32 %v215, %v315
    %v320 = vmul.f32 %v216, %v316
    %v321 = vmul.f32 %v217, %v317
    %v322 = vmul.f32 %v218, %v318
    %v323 = vmul.f32 %v319, %v291
    %v324 = vmul.f32 %v320, %v292
    %v325 = vmul.f32 %v321, %v293
    %v326 = vmul.f32 %v322, %v294
    %v327 = vadd.f32 %v200, %v323
    %v328 = vadd.f32 %v201, %v324
    %v329 = vadd.f32 %v202, %v325
    %v330 = vadd.f32 %v203, %v326
    %s331 = smul.u32 2, 4
    %s332 = smul.addr %s331, 8
    %s333 = scalar_lea.vmem [#allocation2], %s332
    %v334 = vld [vmem:[%s333] sm:$0xff]
    %v335 = vld [vmem:[%s333 + $0x8] sm:$0xff]
    %v336 = vld [vmem:[%s333 + $0x10] sm:$0xff]
    %v337 = vld [vmem:[%s333 + $0x18] sm:$0xff]
    %v338 = vmul.f32 %v69, -0.5
    %v339 = vmul.f32 %v70, -0.5
    %v340 = vmul.f32 %v71, -0.5
    %v341 = vmul.f32 %v72, -0.5
    %v342 = vadd.f32 %v338, 0.75
    %v343 = vadd.f32 %v339, 0.75
    %v344 = vadd.f32 %v340, 0.75
    %v345 = vadd.f32 %v341, 0.75
    %vm346 = vcmp.ge.f32.partialorder %v69, 0.5
    %vm347 = vcmp.ge.f32.partialorder %v70, 0.5
    %vm348 = vcmp.ge.f32.partialorder %v71, 0.5
    %vm349 = vcmp.ge.f32.partialorder %v72, 0.5
    %v350 = vsub.f32 0.0, %v334
    %v351 = vsub.f32 0.0, %v335
    %v352 = vsub.f32 0.0, %v336
    %v353 = vsub.f32 0.0, %v337
    %v354 = vsel %vm346, %v334, %v350
    %v355 = vsel %vm347, %v335, %v351
    %v356 = vsel %vm348, %v336, %v352
    %v357 = vsel %vm349, %v337, %v353
    %v358 = vand.u32 2147483647, %v354
    %v359 = vand.u32 2147483647, %v355
    %v360 = vand.u32 2147483647, %v356
    %v361 = vand.u32 2147483647, %v357
    %v362 = vsub.f32 0.0, %v358
    %v363 = vsub.f32 0.0, %v359
    %v364 = vsub.f32 0.0, %v360
    %v365 = vsub.f32 0.0, %v361
    %v366 = vmul.f32 %v362, 1.442695
    %v367 = vpow.pop %v366
    %v368 = vmul.f32 %v363, 1.442695
    %v369 = vpow.pop %v368
    %v370 = vmul.f32 %v364, 1.442695
    %v371 = vpow.pop %v370
    %v372 = vmul.f32 %v365, 1.442695
    %v373 = vpow.pop %v372
    %v374 = vsub.f32 0.0, %v354
    %v375 = vsub.f32 0.0, %v355
    %v376 = vsub.f32 0.0, %v356
    %v377 = vsub.f32 0.0, %v357
    %v378 = vmax.f32 %v374, 0.0
    %v379 = vmax.f32 %v375, 0.0
    %v380 = vmax.f32 %v376, 0.0
    %v381 = vmax.f32 %v377, 0.0
    %v382 = vadd.f32 %v367, 1.0
    %v383 = vlog2.pop %v382
    %v384 = vmul.f32 %v383, 0.6931472
    %v385 = vmul.f32 -0.5, %v367
    %v386 = vadd.f32 %v385, 1.0
    %v387 = vmul.f32 %v386, %v367
    %v388 = vand.u32 2147483647, %v367
    %vm389 = vcmp.lt.f32.partialorder %v388, 0.0004427343
    %v390 = vsel %vm389, %v387, %v384
    %v391 = vadd.f32 %v369, 1.0
    %v392 = vlog2.pop %v391
    %v393 = vmul.f32 %v392, 0.6931472
    %v394 = vmul.f32 -0.5, %v369
    %v395 = vadd.f32 %v394, 1.0
    %v396 = vmul.f32 %v395, %v369
    %v397 = vand.u32 2147483647, %v369
    %vm398 = vcmp.lt.f32.partialorder %v397, 0.0004427343
    %v399 = vsel %vm398, %v396, %v393
    %v400 = vadd.f32 %v371, 1.0
    %v401 = vlog2.pop %v400
    %v402 = vmul.f32 %v401, 0.6931472
    %v403 = vmul.f32 -0.5, %v371
    %v404 = vadd.f32 %v403, 1.0
    %v405 = vmul.f32 %v404, %v371
    %v406 = vand.u32 2147483647, %v371
    %vm407 = vcmp.lt.f32.partialorder %v406, 0.0004427343
    %v408 = vsel %vm407, %v405, %v402
    %v409 = vadd.f32 %v373, 1.0
    %v410 = vlog2.pop %v409
    %v411 = vmul.f32 %v410, 0.6931472
    %v412 = vmul.f32 -0.5, %v373
    %v413 = vadd.f32 %v412, 1.0
    %v414 = vmul.f32 %v413, %v373
    %v415 = vand.u32 2147483647, %v373
    %vm416 = vcmp.lt.f32.partialorder %v415, 0.0004427343
    %v417 = vsel %vm416, %v414, %v411
    %v418 = vadd.f32 %v378, %v390
    %v419 = vadd.f32 %v379, %v399
    %v420 = vadd.f32 %v380, %v408
    %v421 = vadd.f32 %v381, %v417
    %vm422 = vcmp.ge.f32.partialorder %v354, 0.0
    %vm423 = vcmp.ge.f32.partialorder %v355, 0.0
    %vm424 = vcmp.ge.f32.partialorder %v356, 0.0
    %vm425 = vcmp.ge.f32.partialorder %v357, 0.0
    %v426 = vsel %vm422, %v367, 1.0
    %v427 = vsel %vm423, %v369, 1.0
    %v428 = vsel %vm424, %v371, 1.0
    %v429 = vsel %vm425, %v373, 1.0
    %v430 = vadd.f32 %v367, 1.0
    %v431 = vadd.f32 %v369, 1.0
    %v432 = vadd.f32 %v371, 1.0
    %v433 = vadd.f32 %v373, 1.0
    %v434 = vrcp.pop %v430
    %v435 = vmul.f32 %v426, %v434
    %v436 = vrcp.pop %v431
    %v437 = vmul.f32 %v427, %v436
    %v438 = vrcp.pop %v432
    %v439 = vmul.f32 %v428, %v438
    %v440 = vrcp.pop %v433
    %v441 = vmul.f32 %v429, %v440
    %v442 = vmul.f32 %v435, %v435
    %v443 = vmul.f32 %v437, %v437
    %v444 = vmul.f32 %v439, %v439
    %v445 = vmul.f32 %v441, %v441
    %v446 = vmul.f32 %v342, %v442
    %v447 = vmul.f32 %v343, %v443
    %v448 = vmul.f32 %v344, %v444
    %v449 = vmul.f32 %v345, %v445
    %v450 = vmul.f32 %v446, %v418
    %v451 = vmul.f32 %v447, %v419
    %v452 = vmul.f32 %v448, %v420
    %v453 = vmul.f32 %v449, %v421
    %v454 = vadd.f32 %v327, %v450
    %v455 = vadd.f32 %v328, %v451
    %v456 = vadd.f32 %v329, %v452
    %v457 = vadd.f32 %v330, %v453
    %s458 = smul.u32 3, 4
    %s459 = smul.addr %s458, 8
    %s460 = scalar_lea.vmem [#allocation2], %s459
    %v461 = vld [vmem:[%s460] sm:$0xff]
    %v462 = vld [vmem:[%s460 + $0x8] sm:$0xff]
    %v463 = vld [vmem:[%s460 + $0x10] sm:$0xff]
    %v464 = vld [vmem:[%s460 + $0x18] sm:$0xff]
    %v465 = vmul.f32 %v73, -0.5
    %v466 = vmul.f32 %v74, -0.5
    %v467 = vmul.f32 %v75, -0.5
    %v468 = vmul.f32 %v76, -0.5
    %v469 = vadd.f32 %v465, 0.75
    %v470 = vadd.f32 %v466, 0.75
    %v471 = vadd.f32 %v467, 0.75
    %v472 = vadd.f32 %v468, 0.75
    %vm473 = vcmp.ge.f32.partialorder %v73, 0.5
    %vm474 = vcmp.ge.f32.partialorder %v74, 0.5
    %vm475 = vcmp.ge.f32.partialorder %v75, 0.5
    %vm476 = vcmp.ge.f32.partialorder %v76, 0.5
    %v477 = vsub.f32 0.0, %v461
    %v478 = vsub.f32 0.0, %v462
    %v479 = vsub.f32 0.0, %v463
    %v480 = vsub.f32 0.0, %v464
    %v481 = vsel %vm473, %v461, %v477
    %v482 = vsel %vm474, %v462, %v478
    %v483 = vsel %vm475, %v463, %v479
    %v484 = vsel %vm476, %v464, %v480
    %v485 = vand.u32 2147483647, %v481
    %v486 = vand.u32 2147483647, %v482
    %v487 = vand.u32 2147483647, %v483
    %v488 = vand.u32 2147483647, %v484
    %v489 = vsub.f32 0.0, %v485
    %v490 = vsub.f32 0.0, %v486
    %v491 = vsub.f32 0.0, %v487
    %v492 = vsub.f32 0.0, %v488
    %v493 = vmul.f32 %v489, 1.442695
    %v494 = vpow.pop %v493
    %v495 = vmul.f32 %v490, 1.442695
    %v496 = vpow.pop %v495
    %v497 = vmul.f32 %v491, 1.442695
    %v498 = vpow.pop %v497
    %v499 = vmul.f32 %v492, 1.442695
    %v500 = vpow.pop %v499
    %v501 = vsub.f32 0.0, %v481
    %v502 = vsub.f32 0.0, %v482
    %v503 = vsub.f32 0.0, %v483
    %v504 = vsub.f32 0.0, %v484
    %v505 = vmax.f32 %v501, 0.0
    %v506 = vmax.f32 %v502, 0.0
    %v507 = vmax.f32 %v503, 0.0
    %v508 = vmax.f32 %v504, 0.0
    %v509 = vadd.f32 %v494, 1.0
    %v510 = vlog2.pop %v509
    %v511 = vmul.f32 %v510, 0.6931472
    %v512 = vmul.f32 -0.5, %v494
    %v513 = vadd.f32 %v512, 1.0
    %v514 = vmul.f32 %v513, %v494
    %v515 = vand.u32 2147483647, %v494
    %vm516 = vcmp.lt.f32.partialorder %v515, 0.0004427343
    %v517 = vsel %vm516, %v514, %v511
    %v518 = vadd.f32 %v496, 1.0
    %v519 = vlog2.pop %v518
    %v520 = vmul.f32 %v519, 0.6931472
    %v521 = vmul.f32 -0.5, %v496
    %v522 = vadd.f32 %v521, 1.0
    %v523 = vmul.f32 %v522, %v496
    %v524 = vand.u32 2147483647, %v496
    %vm525 = vcmp.lt.f32.partialorder %v524, 0.0004427343
    %v526 = vsel %vm525, %v523, %v520
    %v527 = vadd.f32 %v498, 1.0
    %v528 = vlog2.pop %v527
    %v529 = vmul.f32 %v528, 0.6931472
    %v530 = vmul.f32 -0.5, %v498
    %v531 = vadd.f32 %v530, 1.0
    %v532 = vmul.f32 %v531, %v498
    %v533 = vand.u32 2147483647, %v498
    %vm534 = vcmp.lt.f32.partialorder %v533, 0.0004427343
    %v535 = vsel %vm534, %v532, %v529
    %v536 = vadd.f32 %v500, 1.0
    %v537 = vlog2.pop %v536
    %v538 = vmul.f32 %v537, 0.6931472
    %v539 = vmul.f32 -0.5, %v500
    %v540 = vadd.f32 %v539, 1.0
    %v541 = vmul.f32 %v540, %v500
    %v542 = vand.u32 2147483647, %v500
    %vm543 = vcmp.lt.f32.partialorder %v542, 0.0004427343
    %v544 = vsel %vm543, %v541, %v538
    %v545 = vadd.f32 %v505, %v517
    %v546 = vadd.f32 %v506, %v526
    %v547 = vadd.f32 %v507, %v535
    %v548 = vadd.f32 %v508, %v544
    %vm549 = vcmp.ge.f32.partialorder %v481, 0.0
    %vm550 = vcmp.ge.f32.partialorder %v482, 0.0
    %vm551 = vcmp.ge.f32.partialorder %v483, 0.0
    %vm552 = vcmp.ge.f32.partialorder %v484, 0.0
    %v553 = vsel %vm549, %v494, 1.0
    %v554 = vsel %vm550, %v496, 1.0
    %v555 = vsel %vm551, %v498, 1.0
    %v556 = vsel %vm552, %v500, 1.0
    %v557 = vadd.f32 %v494, 1.0
    %v558 = vadd.f32 %v496, 1.0
    %v559 = vadd.f32 %v498, 1.0
    %v560 = vadd.f32 %v500, 1.0
    %v561 = vrcp.pop %v557
    %v562 = vmul.f32 %v553, %v561
    %v563 = vrcp.pop %v558
    %v564 = vmul.f32 %v554, %v563
    %v565 = vrcp.pop %v559
    %v566 = vmul.f32 %v555, %v565
    %v567 = vrcp.pop %v560
    %v568 = vmul.f32 %v556, %v567
    %v569 = vmul.f32 %v562, %v562
    %v570 = vmul.f32 %v564, %v564
    %v571 = vmul.f32 %v566, %v566
    %v572 = vmul.f32 %v568, %v568
    %v573 = vmul.f32 %v469, %v569
    %v574 = vmul.f32 %v470, %v570
    %v575 = vmul.f32 %v471, %v571
    %v576 = vmul.f32 %v472, %v572
    %v577 = vmul.f32 %v573, %v545
    %v578 = vmul.f32 %v574, %v546
    %v579 = vmul.f32 %v575, %v547
    %v580 = vmul.f32 %v576, %v548
    %v581 = vadd.f32 %v454, %v577
    %v582 = vadd.f32 %v455, %v578
    %v583 = vadd.f32 %v456, %v579
    %v584 = vadd.f32 %v457, %v580
    %v585 = vadd.f32 %v581, %v582
    %v586 = vadd.f32 %v585, %v583
    %v587 = vadd.f32 %v586, %v584
    %588 = vst [vmem:[#allocation7] sm:$0xff] %v587
    // Predicated region
    $region18: #{tpu_custom_call.1} parent=1 // pred_check
      _
    $region19: #{tpu_custom_call.1} parent=1 // pred_check_branch
      %590 = sbr.rel (0) target = $region21
    $region20: #{tpu_custom_call.1} parent=1 // pred_region
      %s592 = ssub.s32 128, 128
      %593 = vsyncadd [#allocation4], %s592
      %s595 = sshll.u32 [#allocation7], 4
      %s596 = int_to_ptr.vmem [resolvable:$true] %s595
      %598 = dma.vmem_to_hbm [thread:$0]  %s596, 128, %s2, [#allocation4]
    $region21: #{tpu_custom_call.1} parent=1 // pred_fallthru
      _
    // Predicated region
    $region22: #{tpu_custom_call.1} parent=1 // pred_check
      _
    $region23: #{tpu_custom_call.1} parent=1 // pred_check_branch
      %600 = sbr.rel (0) target = $region25
    $region24: #{tpu_custom_call.1} parent=1 // pred_region
      %601 = dma.done [#allocation4], 128
    $region25: #{tpu_custom_call.1} parent=1 // pred_fallthru
      _
    %602 = vsyncpa [#allocation3], 1
    %603 = vsyncpa [#allocation6], 1
    %604 = vsyncpa [#allocation4], 1

</llo_original>
